<compile_context>
chip_gen: v5e
topology: v5e:2x2
jax: 0.10.0
libtpu: 0.0.40
codegen_flags: <defaults>
</compile_context>

<pallas_src>
import functools
import math

import jax
import jax.numpy as jnp
from jax.experimental import pallas as pl
from jax.experimental.pallas import tpu as pltpu

HALF_PI = math.pi / 2.0
CLAMP_LO = -HALF_PI + 0.1
CLAMP_HI = HALF_PI - 0.1
FPAD = 128                       # lane-padded feature width


# ----------------------------------------------------------------------------
# In-kernel transcendental helpers (VALU/EUP-safe ops only, Estrin-evaluated).
# ----------------------------------------------------------------------------
def _tan(x):
    # x is clamped to (-pi/2 + 0.1, pi/2 - 0.1); Taylor series for sin & cos.
    # Estrin-style evaluation shortens the FMA dependency chain (small-N is
    # latency-bound). Division via approx EUP reciprocal + one Newton step
    # (cos ~ 0.1 near the clamp bound, so raw approx error is not acceptable).
    u = x * x
    u2 = u * u
    s_poly = ((1.0 + u * (-1.0 / 6.0))
              + u2 * ((1.0 / 120.0 + u * (-1.0 / 5040.0))
                      + u2 * (1.0 / 362880.0 + u * (-1.0 / 39916800.0))))
    c_poly = ((1.0 + u * (-0.5))
              + u2 * ((1.0 / 24.0 + u * (-1.0 / 720.0))
                      + u2 * (1.0 / 40320.0 + u * (-1.0 / 3628800.0))))
    s = x * s_poly
    r = pl.reciprocal(c_poly, approx=True)
    r = r * (2.0 - c_poly * r)          # one Newton refinement -> ~f32 accuracy
    return s * r


def _atan(x):
    # Range-reduce |x| to [0, 1], Estrin polynomial (~1e-5 rad max error vs
    # libm atan), then unfold. Approx reciprocal is fine here (|a| <= 1).
    ax = jnp.abs(x)
    inv = ax > 1.0
    a = jnp.where(inv, pl.reciprocal(jnp.maximum(ax, 1.0), approx=True), ax)
    w = a * a
    w2 = w * w
    q = ((0.9998660 + w * (-0.3302995))
         + w2 * ((0.1801410 + w * (-0.0851330)) + w2 * 0.0208351))
    p = a * q
    r = jnp.where(inv, HALF_PI - p, p)
    return jnp.where(x < 0.0, -r, r)


# ----------------------------------------------------------------------------
# Single fused Pallas kernel: all three GINNet layers.
# ----------------------------------------------------------------------------
def ginnet_fused_kernel(x_ref, a_ref,
                        w0_ref,                 # layer 0: [Wr0 | Wl0]  (bf16)
                        wl1_ref,                # layer 1: Wl1          (bf16)
                        w2_ref,                 # layer 2: [Wr2 | Wl2]  (bf16)
                        b_ref,                  # [bl0; bl1; bl2] (3, Fpad) f32
                        o_ref, *,
                        eps, lo, hi, fpad, num_classes):
    n, f = x_ref.shape
    a = a_ref[...]                              # (N, N) bf16 (exact int counts)
    b = b_ref[...]                              # (3, Fpad) f32
    b0, b1, b2 = b[0:1, :], b[1:2, :], b[2:3, :]

    def gin_scale(xwl):                         # (1+eps)*xwl, folded when eps==0
        return xwl if eps == 0.0 else (1.0 + eps) * xwl

    # Pad x to 128 lanes inside the kernel (pad cols exactly 0).
    x_b = jnp.concatenate(
        [x_ref[...].astype(jnp.bfloat16),
         jnp.zeros((n, fpad - f), jnp.bfloat16)], axis=1)        # (N, Fpad) bf16

    # ---- layer 0: simplex reparam + GIN + atan -----------------------------
    xw = jnp.dot(x_b, w0_ref[...], preferred_element_type=jnp.float32)  # (N, 2*Fpad)
    x_off = jnp.clip(xw[:, :fpad], lo, hi)
    xwl = xw[:, fpad:]
    agg = jnp.dot(a, xwl.astype(jnp.bfloat16), preferred_element_type=jnp.float32)
    x = _atan(_tan(x_off) + gin_scale(xwl) + agg + b0)           # pad cols stay 0

    # ---- layer 1: identity reparam (no matmul) + GIN + atan ----------------
    x_off = jnp.clip(x, lo, hi)
    xwl = jnp.dot(x.astype(jnp.bfloat16), wl1_ref[...],
                  preferred_element_type=jnp.float32)
    agg = jnp.dot(a, xwl.astype(jnp.bfloat16), preferred_element_type=jnp.float32)
    x = _atan(_tan(x_off) + gin_scale(xwl) + agg + b1)

    # ---- layer 2: simplex reparam + GIN + atan + log_softmax ---------------
    xw = jnp.dot(x.astype(jnp.bfloat16), w2_ref[...],
                 preferred_element_type=jnp.float32)
    x_off = jnp.clip(xw[:, :fpad], lo, hi)
    xwl = xw[:, fpad:]
    agg = jnp.dot(a, xwl.astype(jnp.bfloat16), preferred_element_type=jnp.float32)
    y = _atan(_tan(x_off) + gin_scale(xwl) + agg + b2)

    # log_softmax over dim=1, restricted to the valid (unpadded) class columns.
    col = jax.lax.broadcasted_iota(jnp.int32, y.shape, 1)
    y = jnp.where(col < num_classes, y, -1e30)
    m = jnp.max(y, axis=1, keepdims=True)
    z = y - m
    y = z - jnp.log(jnp.sum(jnp.exp(z), axis=1, keepdims=True))

    o_ref[...] = y.astype(o_ref.dtype)


def ginnet_forward(padded, x, adj_bf16, *, num_classes, fpad=FPAD):
    n, f = x.shape
    kern = functools.partial(ginnet_fused_kernel, eps=0.0,
                             lo=CLAMP_LO, hi=CLAMP_HI,
                             fpad=fpad, num_classes=num_classes)
    full = lambda i: (0, 0)
    out = pl.pallas_call(
        kern,
        grid=(1,),
        in_specs=[
            pl.BlockSpec((n, f), full),             # x, natural shape (no HBM pad)
            pl.BlockSpec((n, n), full),             # dense adjacency (bf16)
            pl.BlockSpec((fpad, 2 * fpad), full),   # [Wr0 | Wl0] (bf16)
            pl.BlockSpec((fpad, fpad), full),       # Wl1 (bf16)
            pl.BlockSpec((fpad, 2 * fpad), full),   # [Wr2 | Wl2] (bf16)
            pl.BlockSpec((3, fpad), full),          # [bl0; bl1; bl2] (f32)
        ],
        out_specs=pl.BlockSpec((n, fpad), full),
        out_shape=jax.ShapeDtypeStruct((n, fpad), jnp.float32),
        compiler_params=pltpu.CompilerParams(
            dimension_semantics=("arbitrary",),
            # Lifts v5e's 16 MiB scoped-VMEM default; matches v6e/v7x defaults.
            vmem_limit_bytes=32 * 1024 * 1024),
    )(x, adj_bf16, padded["w0_cat"], padded["wl1"], padded["w2_cat"],
      padded["bias"])
    return out[:, :num_classes]


# ----------------------------------------------------------------------------
# Parameter setup (plain-JAX glue).
# ----------------------------------------------------------------------------
def projection_simplex(v, radius=1.0):
    """Row-wise projection onto the simplex (JAX port of the torch reference)."""
    n_neuron, n_feat = v.shape
    u = jnp.sort(v, axis=1)
    cssv = jnp.cumsum(u, axis=1) - radius
    ind = jnp.arange(1, n_feat + 1, dtype=v.dtype)
    cond = (u - cssv / ind) > 0
    idx = n_feat - 1 - jnp.argmax(cond[:, ::-1].astype(jnp.int32), axis=1)
    rho = (idx + 1).astype(v.dtype)
    theta = cssv[jnp.arange(n_neuron), idx] / rho
    return jnp.maximum(v - theta[:, None], 0.0)


def make_linear(key, fan_in, fan_out):
    kw, kb = jax.random.split(key)
    bound = 1.0 / math.sqrt(fan_in)
    w = jax.random.uniform(kw, (fan_out, fan_in), jnp.float32, -bound, bound)
    b = jax.random.uniform(kb, (fan_out,), jnp.float32, -bound, bound)
    return w.T, b.reshape(1, fan_out)                 # stored transposed for x @ W


def init_ginnet_params(key, num_features, num_classes, nhid):
    k = jax.random.split(key, 6)
    bound0 = 1.0 / math.sqrt(num_features)
    wr0_raw = jax.random.uniform(k[0], (nhid, num_features), jnp.float32, -bound0, bound0)
    wr0 = projection_simplex(wr0_raw).T               # (num_features, nhid), no bias
    bound2 = 1.0 / math.sqrt(nhid)
    wr2_raw = jax.random.uniform(k[1], (num_classes, nhid), jnp.float32, -bound2, bound2)
    wr2 = projection_simplex(wr2_raw).T               # (nhid, num_classes), no bias
    # reparametrization[1] = nn.Identity()  -> skipped inside the kernel.

    wl0, bl0 = make_linear(k[2], num_features, nhid)
    wl1, bl1 = make_linear(k[3], nhid, nhid)
    wl2, bl2 = make_linear(k[4], nhid, num_classes)
    return dict(wr0=wr0, wr2=wr2,
                wl0=wl0, bl0=bl0, wl1=wl1, bl1=bl1, wl2=wl2, bl2=bl2)


def pad_params(params, fpad=FPAD):
    """Zero-pad weights/biases to 128 lanes, pre-concat shared-LHS matmuls,
    cast weights to bf16 (pad entries stay exact zeros) and stack biases."""
    def pad2(w):
        return jnp.zeros((fpad, fpad), jnp.float32).at[:w.shape[0], :w.shape[1]].set(w)

    def padb(b):
        return jnp.zeros((1, fpad), jnp.float32).at[:, :b.shape[1]].set(b)

    w0_cat = jnp.concatenate([pad2(params["wr0"]), pad2(params["wl0"])], axis=1)
    w2_cat = jnp.concatenate([pad2(params["wr2"]), pad2(params["wl2"])], axis=1)
    bias = jnp.concatenate(
        [padb(params["bl0"]), padb(params["bl1"]), padb(params["bl2"])], axis=0)
    return dict(w0_cat=w0_cat.astype(jnp.bfloat16),
                wl1=pad2(params["wl1"]).astype(jnp.bfloat16),
                w2_cat=w2_cat.astype(jnp.bfloat16),
                bias=bias)                             # (3, fpad) f32


# ----------------------------------------------------------------------------
if __name__ == "__main__":
    num_nodes = 16
    num_features = 8
    nhid = 32
    num_classes = 4

    root = jax.random.PRNGKey(0)
    k_x, k_e1, k_e2, k_p = jax.random.split(root, 4)

    # Node features (data.x)
    x = jax.random.normal(k_x, (num_nodes, num_features), jnp.float32)

    # edge_index: bidirectional ring + a few random extra edges (deterministic)
    ring_src = jnp.arange(num_nodes)
    ring_dst = (jnp.arange(num_nodes) + 1) % num_nodes
    ex_src = jax.random.randint(k_e1, (4,), 0, num_nodes)
    ex_dst = jax.random.randint(k_e2, (4,), 0, num_nodes)
    src = jnp.concatenate([ring_src, ring_dst, ex_src, ex_dst])
    dst = jnp.concatenate([ring_dst, ring_src, ex_dst, ex_src])
    edge_index = jnp.stack([src, dst]).astype(jnp.int32)      # (2, 40)

    # Dense adjacency: A[i, j] = #edges j -> i, so (A @ x)_i = sum_{j in N(i)} x_j.
    # Small integer counts are exactly representable in bf16.
    adj = jnp.zeros((num_nodes, num_nodes), jnp.float32).at[
        edge_index[1], edge_index[0]].add(1.0)
    adj_bf16 = adj.astype(jnp.bfloat16)

    params = init_ginnet_params(k_p, num_features, num_classes, nhid)
    padded = pad_params(params)

    out = ginnet_forward(padded, x, adj_bf16, num_classes=num_classes)
    out = jax.block_until_ready(out)
    assert out.shape == (num_nodes, num_classes)
    assert bool(jnp.all(jnp.isfinite(out)))
    print("KERNEL_OK")
</pallas_src>

<mosaic_0001>
module attributes {stable_mosaic.version = 11 : i64} {
  func.func @ginnet_fused_kernel(%arg0: i32, %arg1: memref<16x8xf32, #tpu.memory_space<vmem>>, %arg2: memref<16x16xbf16, #tpu.memory_space<vmem>>, %arg3: memref<128x256xbf16, #tpu.memory_space<vmem>>, %arg4: memref<128x128xbf16, #tpu.memory_space<vmem>>, %arg5: memref<128x256xbf16, #tpu.memory_space<vmem>>, %arg6: memref<3x128xf32, #tpu.memory_space<vmem>>, %arg7: memref<16x128xf32, #tpu.memory_space<vmem>>) attributes {dimension_semantics = [#tpu.dimension_semantics<arbitrary>], iteration_bounds = array<i64: 1>, scalar_prefetch = 0 : i64, scratch_operands = 0 : i64, tpu.core_type = #tpu.core_type<tc>, window_params = [{pipeline_mode = #tpu.pipeline_mode<synchronous>, transform_indices = @transform_0, window_bounds = array<i64: 16, 8>}, {pipeline_mode = #tpu.pipeline_mode<synchronous>, transform_indices = @transform_1, window_bounds = array<i64: 16, 16>}, {pipeline_mode = #tpu.pipeline_mode<synchronous>, transform_indices = @transform_2, window_bounds = array<i64: 128, 256>}, {pipeline_mode = #tpu.pipeline_mode<synchronous>, transform_indices = @transform_3, window_bounds = array<i64: 128, 128>}, {pipeline_mode = #tpu.pipeline_mode<synchronous>, transform_indices = @transform_4, window_bounds = array<i64: 128, 256>}, {pipeline_mode = #tpu.pipeline_mode<synchronous>, transform_indices = @transform_5, window_bounds = array<i64: 3, 128>}, {pipeline_mode = #tpu.pipeline_mode<synchronous>, transform_indices = @transform_6, window_bounds = array<i64: 16, 128>}]} {
    %c0 = arith.constant 0 : index
    %c0_0 = arith.constant 0 : index
    %0 = vector.load %arg2[%c0, %c0_0] : memref<16x16xbf16, #tpu.memory_space<vmem>>, vector<16x16xbf16>
    %c0_1 = arith.constant 0 : index
    %c0_2 = arith.constant 0 : index
    %1 = vector.load %arg6[%c0_1, %c0_2] : memref<3x128xf32, #tpu.memory_space<vmem>>, vector<3x128xf32>
    %2 = vector.extract_strided_slice %1 {offsets = [0, 0], sizes = [1, 128], strides = [1, 1]} : vector<3x128xf32> to vector<1x128xf32>
    %3 = vector.extract_strided_slice %1 {offsets = [1, 0], sizes = [1, 128], strides = [1, 1]} : vector<3x128xf32> to vector<1x128xf32>
    %4 = vector.extract_strided_slice %1 {offsets = [2, 0], sizes = [1, 128], strides = [1, 1]} : vector<3x128xf32> to vector<1x128xf32>
    %c0_3 = arith.constant 0 : index
    %c0_4 = arith.constant 0 : index
    %5 = vector.load %arg1[%c0_3, %c0_4] : memref<16x8xf32, #tpu.memory_space<vmem>>, vector<16x8xf32>
    %6 = arith.truncf %5 : vector<16x8xf32> to vector<16x8xbf16>
    %cst = arith.constant 0.000000e+00 : bf16
    %7 = vector.broadcast %cst : bf16 to vector<16x120xbf16>
    %8 = tpu.concatenate %6, %7 in 1 : vector<16x8xbf16>, vector<16x120xbf16> -> vector<16x128xbf16>
    %c0_5 = arith.constant 0 : index
    %c0_6 = arith.constant 0 : index
    %9 = vector.load %arg3[%c0_5, %c0_6] : memref<128x256xbf16, #tpu.memory_space<vmem>>, vector<128x256xbf16>
    %cst_7 = arith.constant dense<0.000000e+00> : vector<16x256xf32>
    %10 = tpu.matmul %8, %9, %cst_7 {dimension_numbers = #tpu.dot_dimension_numbers<[1], [0], [0], [1], [0, 0, 1, 1], [], []>} : vector<16x128xbf16>, vector<128x256xbf16>, vector<16x256xf32> -> vector<16x256xf32>
    %11 = vector.extract_strided_slice %10 {offsets = [0, 0], sizes = [16, 128], strides = [1, 1]} : vector<16x256xf32> to vector<16x128xf32>
    %cst_8 = arith.constant -1.47079635 : f32
    %cst_9 = arith.constant 1.47079635 : f32
    %12 = vector.broadcast %cst_8 : f32 to vector<16x128xf32>
    %13 = arith.maximumf %12, %11 : vector<16x128xf32>
    %14 = vector.broadcast %cst_9 : f32 to vector<16x128xf32>
    %15 = arith.minimumf %14, %13 : vector<16x128xf32>
    %16 = vector.extract_strided_slice %10 {offsets = [0, 128], sizes = [16, 128], strides = [1, 1]} : vector<16x256xf32> to vector<16x128xf32>
    %17 = arith.truncf %16 : vector<16x128xf32> to vector<16x128xbf16>
    %cst_10 = arith.constant dense<0.000000e+00> : vector<16x128xf32>
    %18 = tpu.matmul %0, %17, %cst_10 {dimension_numbers = #tpu.dot_dimension_numbers<[1], [0], [0], [1], [0, 0, 1, 1], [], []>} : vector<16x16xbf16>, vector<16x128xbf16>, vector<16x128xf32> -> vector<16x128xf32>
    %19 = arith.mulf %15, %15 : vector<16x128xf32>
    %20 = arith.mulf %19, %19 : vector<16x128xf32>
    %cst_11 = arith.constant -0.166666672 : f32
    %21 = vector.broadcast %cst_11 : f32 to vector<16x128xf32>
    %22 = arith.mulf %19, %21 : vector<16x128xf32>
    %cst_12 = arith.constant 1.000000e+00 : f32
    %23 = vector.broadcast %cst_12 : f32 to vector<16x128xf32>
    %24 = arith.addf %23, %22 : vector<16x128xf32>
    %cst_13 = arith.constant -1.98412701E-4 : f32
    %25 = vector.broadcast %cst_13 : f32 to vector<16x128xf32>
    %26 = arith.mulf %19, %25 : vector<16x128xf32>
    %cst_14 = arith.constant 0.00833333377 : f32
    %27 = vector.broadcast %cst_14 : f32 to vector<16x128xf32>
    %28 = arith.addf %27, %26 : vector<16x128xf32>
    %cst_15 = arith.constant -2.50521079E-8 : f32
    %29 = vector.broadcast %cst_15 : f32 to vector<16x128xf32>
    %30 = arith.mulf %19, %29 : vector<16x128xf32>
    %cst_16 = arith.constant 2.75573188E-6 : f32
    %31 = vector.broadcast %cst_16 : f32 to vector<16x128xf32>
    %32 = arith.addf %31, %30 : vector<16x128xf32>
    %33 = arith.mulf %20, %32 : vector<16x128xf32>
    %34 = arith.addf %28, %33 : vector<16x128xf32>
    %35 = arith.mulf %20, %34 : vector<16x128xf32>
    %36 = arith.addf %24, %35 : vector<16x128xf32>
    %cst_17 = arith.constant -5.000000e-01 : f32
    %37 = vector.broadcast %cst_17 : f32 to vector<16x128xf32>
    %38 = arith.mulf %19, %37 : vector<16x128xf32>
    %cst_18 = arith.constant 1.000000e+00 : f32
    %39 = vector.broadcast %cst_18 : f32 to vector<16x128xf32>
    %40 = arith.addf %39, %38 : vector<16x128xf32>
    %cst_19 = arith.constant -0.00138888892 : f32
    %41 = vector.broadcast %cst_19 : f32 to vector<16x128xf32>
    %42 = arith.mulf %19, %41 : vector<16x128xf32>
    %cst_20 = arith.constant 0.0416666679 : f32
    %43 = vector.broadcast %cst_20 : f32 to vector<16x128xf32>
    %44 = arith.addf %43, %42 : vector<16x128xf32>
    %cst_21 = arith.constant -2.755732E-7 : f32
    %45 = vector.broadcast %cst_21 : f32 to vector<16x128xf32>
    %46 = arith.mulf %19, %45 : vector<16x128xf32>
    %cst_22 = arith.constant 2.48015876E-5 : f32
    %47 = vector.broadcast %cst_22 : f32 to vector<16x128xf32>
    %48 = arith.addf %47, %46 : vector<16x128xf32>
    %49 = arith.mulf %20, %48 : vector<16x128xf32>
    %50 = arith.addf %44, %49 : vector<16x128xf32>
    %51 = arith.mulf %20, %50 : vector<16x128xf32>
    %52 = arith.addf %40, %51 : vector<16x128xf32>
    %53 = arith.mulf %15, %36 : vector<16x128xf32>
    %54 = tpu.reciprocal %52 {approx = true} : vector<16x128xf32> -> vector<16x128xf32>
    %55 = arith.mulf %52, %54 : vector<16x128xf32>
    %cst_23 = arith.constant 2.000000e+00 : f32
    %56 = vector.broadcast %cst_23 : f32 to vector<16x128xf32>
    %57 = arith.subf %56, %55 : vector<16x128xf32>
    %58 = arith.mulf %54, %57 : vector<16x128xf32>
    %59 = arith.mulf %53, %58 : vector<16x128xf32>
    %60 = arith.addf %59, %16 : vector<16x128xf32>
    %61 = arith.addf %60, %18 : vector<16x128xf32>
    %62 = vector.broadcast %2 : vector<1x128xf32> to vector<16x128xf32>
    %63 = arith.addf %61, %62 : vector<16x128xf32>
    %64 = math.absf %63 : vector<16x128xf32>
    %cst_24 = arith.constant 1.000000e+00 : f32
    %65 = vector.broadcast %cst_24 : f32 to vector<16x128xf32>
    %66 = arith.cmpf ogt, %64, %65 : vector<16x128xf32>
    %cst_25 = arith.constant 1.000000e+00 : f32
    %67 = vector.broadcast %cst_25 : f32 to vector<16x128xf32>
    %68 = arith.maximumf %64, %67 : vector<16x128xf32>
    %69 = tpu.reciprocal %68 {approx = true} : vector<16x128xf32> -> vector<16x128xf32>
    %70 = arith.select %66, %69, %64 : vector<16x128xi1>, vector<16x128xf32>
    %71 = arith.mulf %70, %70 : vector<16x128xf32>
    %72 = arith.mulf %71, %71 : vector<16x128xf32>
    %cst_26 = arith.constant -0.330299497 : f32
    %73 = vector.broadcast %cst_26 : f32 to vector<16x128xf32>
    %74 = arith.mulf %71, %73 : vector<16x128xf32>
    %cst_27 = arith.constant 9.998660e-01 : f32
    %75 = vector.broadcast %cst_27 : f32 to vector<16x128xf32>
    %76 = arith.addf %75, %74 : vector<16x128xf32>
    %cst_28 = arith.constant -8.513300e-02 : f32
    %77 = vector.broadcast %cst_28 : f32 to vector<16x128xf32>
    %78 = arith.mulf %71, %77 : vector<16x128xf32>
    %cst_29 = arith.constant 1.801410e-01 : f32
    %79 = vector.broadcast %cst_29 : f32 to vector<16x128xf32>
    %80 = arith.addf %79, %78 : vector<16x128xf32>
    %cst_30 = arith.constant 2.083510e-02 : f32
    %81 = vector.broadcast %cst_30 : f32 to vector<16x128xf32>
    %82 = arith.mulf %72, %81 : vector<16x128xf32>
    %83 = arith.addf %80, %82 : vector<16x128xf32>
    %84 = arith.mulf %72, %83 : vector<16x128xf32>
    %85 = arith.addf %76, %84 : vector<16x128xf32>
    %86 = arith.mulf %70, %85 : vector<16x128xf32>
    %cst_31 = arith.constant 1.57079637 : f32
    %87 = vector.broadcast %cst_31 : f32 to vector<16x128xf32>
    %88 = arith.subf %87, %86 : vector<16x128xf32>
    %89 = arith.select %66, %88, %86 : vector<16x128xi1>, vector<16x128xf32>
    %cst_32 = arith.constant 0.000000e+00 : f32
    %90 = vector.broadcast %cst_32 : f32 to vector<16x128xf32>
    %91 = arith.cmpf olt, %63, %90 : vector<16x128xf32>
    %cst_33 = arith.constant 0.000000e+00 : f32
    %92 = vector.broadcast %cst_33 : f32 to vector<16x128xf32>
    %93 = arith.subf %92, %89 : vector<16x128xf32>
    %94 = arith.select %91, %93, %89 : vector<16x128xi1>, vector<16x128xf32>
    %cst_34 = arith.constant -1.47079635 : f32
    %cst_35 = arith.constant 1.47079635 : f32
    %95 = vector.broadcast %cst_34 : f32 to vector<16x128xf32>
    %96 = arith.maximumf %95, %94 : vector<16x128xf32>
    %97 = vector.broadcast %cst_35 : f32 to vector<16x128xf32>
    %98 = arith.minimumf %97, %96 : vector<16x128xf32>
    %99 = arith.truncf %94 : vector<16x128xf32> to vector<16x128xbf16>
    %c0_36 = arith.constant 0 : index
    %c0_37 = arith.constant 0 : index
    %100 = vector.load %arg4[%c0_36, %c0_37] : memref<128x128xbf16, #tpu.memory_space<vmem>>, vector<128x128xbf16>
    %cst_38 = arith.constant dense<0.000000e+00> : vector<16x128xf32>
    %101 = tpu.matmul %99, %100, %cst_38 {dimension_numbers = #tpu.dot_dimension_numbers<[1], [0], [0], [1], [0, 0, 1, 1], [], []>} : vector<16x128xbf16>, vector<128x128xbf16>, vector<16x128xf32> -> vector<16x128xf32>
    %102 = arith.truncf %101 : vector<16x128xf32> to vector<16x128xbf16>
    %cst_39 = arith.constant dense<0.000000e+00> : vector<16x128xf32>
    %103 = tpu.matmul %0, %102, %cst_39 {dimension_numbers = #tpu.dot_dimension_numbers<[1], [0], [0], [1], [0, 0, 1, 1], [], []>} : vector<16x16xbf16>, vector<16x128xbf16>, vector<16x128xf32> -> vector<16x128xf32>
    %104 = arith.mulf %98, %98 : vector<16x128xf32>
    %105 = arith.mulf %104, %104 : vector<16x128xf32>
    %cst_40 = arith.constant -0.166666672 : f32
    %106 = vector.broadcast %cst_40 : f32 to vector<16x128xf32>
    %107 = arith.mulf %104, %106 : vector<16x128xf32>
    %cst_41 = arith.constant 1.000000e+00 : f32
    %108 = vector.broadcast %cst_41 : f32 to vector<16x128xf32>
    %109 = arith.addf %108, %107 : vector<16x128xf32>
    %cst_42 = arith.constant -1.98412701E-4 : f32
    %110 = vector.broadcast %cst_42 : f32 to vector<16x128xf32>
    %111 = arith.mulf %104, %110 : vector<16x128xf32>
    %cst_43 = arith.constant 0.00833333377 : f32
    %112 = vector.broadcast %cst_43 : f32 to vector<16x128xf32>
    %113 = arith.addf %112, %111 : vector<16x128xf32>
    %cst_44 = arith.constant -2.50521079E-8 : f32
    %114 = vector.broadcast %cst_44 : f32 to vector<16x128xf32>
    %115 = arith.mulf %104, %114 : vector<16x128xf32>
    %cst_45 = arith.constant 2.75573188E-6 : f32
    %116 = vector.broadcast %cst_45 : f32 to vector<16x128xf32>
    %117 = arith.addf %116, %115 : vector<16x128xf32>
    %118 = arith.mulf %105, %117 : vector<16x128xf32>
    %119 = arith.addf %113, %118 : vector<16x128xf32>
    %120 = arith.mulf %105, %119 : vector<16x128xf32>
    %121 = arith.addf %109, %120 : vector<16x128xf32>
    %cst_46 = arith.constant -5.000000e-01 : f32
    %122 = vector.broadcast %cst_46 : f32 to vector<16x128xf32>
    %123 = arith.mulf %104, %122 : vector<16x128xf32>
    %cst_47 = arith.constant 1.000000e+00 : f32
    %124 = vector.broadcast %cst_47 : f32 to vector<16x128xf32>
    %125 = arith.addf %124, %123 : vector<16x128xf32>
    %cst_48 = arith.constant -0.00138888892 : f32
    %126 = vector.broadcast %cst_48 : f32 to vector<16x128xf32>
    %127 = arith.mulf %104, %126 : vector<16x128xf32>
    %cst_49 = arith.constant 0.0416666679 : f32
    %128 = vector.broadcast %cst_49 : f32 to vector<16x128xf32>
    %129 = arith.addf %128, %127 : vector<16x128xf32>
    %cst_50 = arith.constant -2.755732E-7 : f32
    %130 = vector.broadcast %cst_50 : f32 to vector<16x128xf32>
    %131 = arith.mulf %104, %130 : vector<16x128xf32>
    %cst_51 = arith.constant 2.48015876E-5 : f32
    %132 = vector.broadcast %cst_51 : f32 to vector<16x128xf32>
    %133 = arith.addf %132, %131 : vector<16x128xf32>
    %134 = arith.mulf %105, %133 : vector<16x128xf32>
    %135 = arith.addf %129, %134 : vector<16x128xf32>
    %136 = arith.mulf %105, %135 : vector<16x128xf32>
    %137 = arith.addf %125, %136 : vector<16x128xf32>
    %138 = arith.mulf %98, %121 : vector<16x128xf32>
    %139 = tpu.reciprocal %137 {approx = true} : vector<16x128xf32> -> vector<16x128xf32>
    %140 = arith.mulf %137, %139 : vector<16x128xf32>
    %cst_52 = arith.constant 2.000000e+00 : f32
    %141 = vector.broadcast %cst_52 : f32 to vector<16x128xf32>
    %142 = arith.subf %141, %140 : vector<16x128xf32>
    %143 = arith.mulf %139, %142 : vector<16x128xf32>
    %144 = arith.mulf %138, %143 : vector<16x128xf32>
    %145 = arith.addf %144, %101 : vector<16x128xf32>
    %146 = arith.addf %145, %103 : vector<16x128xf32>
    %147 = vector.broadcast %3 : vector<1x128xf32> to vector<16x128xf32>
    %148 = arith.addf %146, %147 : vector<16x128xf32>
    %149 = math.absf %148 : vector<16x128xf32>
    %cst_53 = arith.constant 1.000000e+00 : f32
    %150 = vector.broadcast %cst_53 : f32 to vector<16x128xf32>
    %151 = arith.cmpf ogt, %149, %150 : vector<16x128xf32>
    %cst_54 = arith.constant 1.000000e+00 : f32
    %152 = vector.broadcast %cst_54 : f32 to vector<16x128xf32>
    %153 = arith.maximumf %149, %152 : vector<16x128xf32>
    %154 = tpu.reciprocal %153 {approx = true} : vector<16x128xf32> -> vector<16x128xf32>
    %155 = arith.select %151, %154, %149 : vector<16x128xi1>, vector<16x128xf32>
    %156 = arith.mulf %155, %155 : vector<16x128xf32>
    %157 = arith.mulf %156, %156 : vector<16x128xf32>
    %cst_55 = arith.constant -0.330299497 : f32
    %158 = vector.broadcast %cst_55 : f32 to vector<16x128xf32>
    %159 = arith.mulf %156, %158 : vector<16x128xf32>
    %cst_56 = arith.constant 9.998660e-01 : f32
    %160 = vector.broadcast %cst_56 : f32 to vector<16x128xf32>
    %161 = arith.addf %160, %159 : vector<16x128xf32>
    %cst_57 = arith.constant -8.513300e-02 : f32
    %162 = vector.broadcast %cst_57 : f32 to vector<16x128xf32>
    %163 = arith.mulf %156, %162 : vector<16x128xf32>
    %cst_58 = arith.constant 1.801410e-01 : f32
    %164 = vector.broadcast %cst_58 : f32 to vector<16x128xf32>
    %165 = arith.addf %164, %163 : vector<16x128xf32>
    %cst_59 = arith.constant 2.083510e-02 : f32
    %166 = vector.broadcast %cst_59 : f32 to vector<16x128xf32>
    %167 = arith.mulf %157, %166 : vector<16x128xf32>
    %168 = arith.addf %165, %167 : vector<16x128xf32>
    %169 = arith.mulf %157, %168 : vector<16x128xf32>
    %170 = arith.addf %161, %169 : vector<16x128xf32>
    %171 = arith.mulf %155, %170 : vector<16x128xf32>
    %cst_60 = arith.constant 1.57079637 : f32
    %172 = vector.broadcast %cst_60 : f32 to vector<16x128xf32>
    %173 = arith.subf %172, %171 : vector<16x128xf32>
    %174 = arith.select %151, %173, %171 : vector<16x128xi1>, vector<16x128xf32>
    %cst_61 = arith.constant 0.000000e+00 : f32
    %175 = vector.broadcast %cst_61 : f32 to vector<16x128xf32>
    %176 = arith.cmpf olt, %148, %175 : vector<16x128xf32>
    %cst_62 = arith.constant 0.000000e+00 : f32
    %177 = vector.broadcast %cst_62 : f32 to vector<16x128xf32>
    %178 = arith.subf %177, %174 : vector<16x128xf32>
    %179 = arith.select %176, %178, %174 : vector<16x128xi1>, vector<16x128xf32>
    %180 = arith.truncf %179 : vector<16x128xf32> to vector<16x128xbf16>
    %c0_63 = arith.constant 0 : index
    %c0_64 = arith.constant 0 : index
    %181 = vector.load %arg5[%c0_63, %c0_64] : memref<128x256xbf16, #tpu.memory_space<vmem>>, vector<128x256xbf16>
    %cst_65 = arith.constant dense<0.000000e+00> : vector<16x256xf32>
    %182 = tpu.matmul %180, %181, %cst_65 {dimension_numbers = #tpu.dot_dimension_numbers<[1], [0], [0], [1], [0, 0, 1, 1], [], []>} : vector<16x128xbf16>, vector<128x256xbf16>, vector<16x256xf32> -> vector<16x256xf32>
    %183 = vector.extract_strided_slice %182 {offsets = [0, 0], sizes = [16, 128], strides = [1, 1]} : vector<16x256xf32> to vector<16x128xf32>
    %cst_66 = arith.constant -1.47079635 : f32
    %cst_67 = arith.constant 1.47079635 : f32
    %184 = vector.broadcast %cst_66 : f32 to vector<16x128xf32>
    %185 = arith.maximumf %184, %183 : vector<16x128xf32>
    %186 = vector.broadcast %cst_67 : f32 to vector<16x128xf32>
    %187 = arith.minimumf %186, %185 : vector<16x128xf32>
    %188 = vector.extract_strided_slice %182 {offsets = [0, 128], sizes = [16, 128], strides = [1, 1]} : vector<16x256xf32> to vector<16x128xf32>
    %189 = arith.truncf %188 : vector<16x128xf32> to vector<16x128xbf16>
    %cst_68 = arith.constant dense<0.000000e+00> : vector<16x128xf32>
    %190 = tpu.matmul %0, %189, %cst_68 {dimension_numbers = #tpu.dot_dimension_numbers<[1], [0], [0], [1], [0, 0, 1, 1], [], []>} : vector<16x16xbf16>, vector<16x128xbf16>, vector<16x128xf32> -> vector<16x128xf32>
    %191 = arith.mulf %187, %187 : vector<16x128xf32>
    %192 = arith.mulf %191, %191 : vector<16x128xf32>
    %cst_69 = arith.constant -0.166666672 : f32
    %193 = vector.broadcast %cst_69 : f32 to vector<16x128xf32>
    %194 = arith.mulf %191, %193 : vector<16x128xf32>
    %cst_70 = arith.constant 1.000000e+00 : f32
    %195 = vector.broadcast %cst_70 : f32 to vector<16x128xf32>
    %196 = arith.addf %195, %194 : vector<16x128xf32>
    %cst_71 = arith.constant -1.98412701E-4 : f32
    %197 = vector.broadcast %cst_71 : f32 to vector<16x128xf32>
    %198 = arith.mulf %191, %197 : vector<16x128xf32>
    %cst_72 = arith.constant 0.00833333377 : f32
    %199 = vector.broadcast %cst_72 : f32 to vector<16x128xf32>
    %200 = arith.addf %199, %198 : vector<16x128xf32>
    %cst_73 = arith.constant -2.50521079E-8 : f32
    %201 = vector.broadcast %cst_73 : f32 to vector<16x128xf32>
    %202 = arith.mulf %191, %201 : vector<16x128xf32>
    %cst_74 = arith.constant 2.75573188E-6 : f32
    %203 = vector.broadcast %cst_74 : f32 to vector<16x128xf32>
    %204 = arith.addf %203, %202 : vector<16x128xf32>
    %205 = arith.mulf %192, %204 : vector<16x128xf32>
    %206 = arith.addf %200, %205 : vector<16x128xf32>
    %207 = arith.mulf %192, %206 : vector<16x128xf32>
    %208 = arith.addf %196, %207 : vector<16x128xf32>
    %cst_75 = arith.constant -5.000000e-01 : f32
    %209 = vector.broadcast %cst_75 : f32 to vector<16x128xf32>
    %210 = arith.mulf %191, %209 : vector<16x128xf32>
    %cst_76 = arith.constant 1.000000e+00 : f32
    %211 = vector.broadcast %cst_76 : f32 to vector<16x128xf32>
    %212 = arith.addf %211, %210 : vector<16x128xf32>
    %cst_77 = arith.constant -0.00138888892 : f32
    %213 = vector.broadcast %cst_77 : f32 to vector<16x128xf32>
    %214 = arith.mulf %191, %213 : vector<16x128xf32>
    %cst_78 = arith.constant 0.0416666679 : f32
    %215 = vector.broadcast %cst_78 : f32 to vector<16x128xf32>
    %216 = arith.addf %215, %214 : vector<16x128xf32>
    %cst_79 = arith.constant -2.755732E-7 : f32
    %217 = vector.broadcast %cst_79 : f32 to vector<16x128xf32>
    %218 = arith.mulf %191, %217 : vector<16x128xf32>
    %cst_80 = arith.constant 2.48015876E-5 : f32
    %219 = vector.broadcast %cst_80 : f32 to vector<16x128xf32>
    %220 = arith.addf %219, %218 : vector<16x128xf32>
    %221 = arith.mulf %192, %220 : vector<16x128xf32>
    %222 = arith.addf %216, %221 : vector<16x128xf32>
    %223 = arith.mulf %192, %222 : vector<16x128xf32>
    %224 = arith.addf %212, %223 : vector<16x128xf32>
    %225 = arith.mulf %187, %208 : vector<16x128xf32>
    %226 = tpu.reciprocal %224 {approx = true} : vector<16x128xf32> -> vector<16x128xf32>
    %227 = arith.mulf %224, %226 : vector<16x128xf32>
    %cst_81 = arith.constant 2.000000e+00 : f32
    %228 = vector.broadcast %cst_81 : f32 to vector<16x128xf32>
    %229 = arith.subf %228, %227 : vector<16x128xf32>
    %230 = arith.mulf %226, %229 : vector<16x128xf32>
    %231 = arith.mulf %225, %230 : vector<16x128xf32>
    %232 = arith.addf %231, %188 : vector<16x128xf32>
    %233 = arith.addf %232, %190 : vector<16x128xf32>
    %234 = vector.broadcast %4 : vector<1x128xf32> to vector<16x128xf32>
    %235 = arith.addf %233, %234 : vector<16x128xf32>
    %236 = math.absf %235 : vector<16x128xf32>
    %cst_82 = arith.constant 1.000000e+00 : f32
    %237 = vector.broadcast %cst_82 : f32 to vector<16x128xf32>
    %238 = arith.cmpf ogt, %236, %237 : vector<16x128xf32>
    %cst_83 = arith.constant 1.000000e+00 : f32
    %239 = vector.broadcast %cst_83 : f32 to vector<16x128xf32>
    %240 = arith.maximumf %236, %239 : vector<16x128xf32>
    %241 = tpu.reciprocal %240 {approx = true} : vector<16x128xf32> -> vector<16x128xf32>
    %242 = arith.select %238, %241, %236 : vector<16x128xi1>, vector<16x128xf32>
    %243 = arith.mulf %242, %242 : vector<16x128xf32>
    %244 = arith.mulf %243, %243 : vector<16x128xf32>
    %cst_84 = arith.constant -0.330299497 : f32
    %245 = vector.broadcast %cst_84 : f32 to vector<16x128xf32>
    %246 = arith.mulf %243, %245 : vector<16x128xf32>
    %cst_85 = arith.constant 9.998660e-01 : f32
    %247 = vector.broadcast %cst_85 : f32 to vector<16x128xf32>
    %248 = arith.addf %247, %246 : vector<16x128xf32>
    %cst_86 = arith.constant -8.513300e-02 : f32
    %249 = vector.broadcast %cst_86 : f32 to vector<16x128xf32>
    %250 = arith.mulf %243, %249 : vector<16x128xf32>
    %cst_87 = arith.constant 1.801410e-01 : f32
    %251 = vector.broadcast %cst_87 : f32 to vector<16x128xf32>
    %252 = arith.addf %251, %250 : vector<16x128xf32>
    %cst_88 = arith.constant 2.083510e-02 : f32
    %253 = vector.broadcast %cst_88 : f32 to vector<16x128xf32>
    %254 = arith.mulf %244, %253 : vector<16x128xf32>
    %255 = arith.addf %252, %254 : vector<16x128xf32>
    %256 = arith.mulf %244, %255 : vector<16x128xf32>
    %257 = arith.addf %248, %256 : vector<16x128xf32>
    %258 = arith.mulf %242, %257 : vector<16x128xf32>
    %cst_89 = arith.constant 1.57079637 : f32
    %259 = vector.broadcast %cst_89 : f32 to vector<16x128xf32>
    %260 = arith.subf %259, %258 : vector<16x128xf32>
    %261 = arith.select %238, %260, %258 : vector<16x128xi1>, vector<16x128xf32>
    %cst_90 = arith.constant 0.000000e+00 : f32
    %262 = vector.broadcast %cst_90 : f32 to vector<16x128xf32>
    %263 = arith.cmpf olt, %235, %262 : vector<16x128xf32>
    %cst_91 = arith.constant 0.000000e+00 : f32
    %264 = vector.broadcast %cst_91 : f32 to vector<16x128xf32>
    %265 = arith.subf %264, %261 : vector<16x128xf32>
    %266 = arith.select %263, %265, %261 : vector<16x128xi1>, vector<16x128xf32>
    %267 = tpu.iota {dimensions = array<i32: 1>} : vector<16x128xi32>
    %c4_i32 = arith.constant 4 : i32
    %268 = vector.broadcast %c4_i32 : i32 to vector<16x128xi32>
    %269 = arith.cmpi slt, %267, %268 : vector<16x128xi32>
    %cst_92 = arith.constant -1.000000e+30 : f32
    %270 = vector.broadcast %cst_92 : f32 to vector<16x128xf32>
    %271 = arith.select %269, %266, %270 : vector<16x128xi1>, vector<16x128xf32>
    %cst_93 = arith.constant dense<0xFF800000> : vector<16xf32>
    %272 = vector.multi_reduction <maximumf>, %271, %cst_93 [1] : vector<16x128xf32> to vector<16xf32>
    %273 = vector.shape_cast %272 : vector<16xf32> to vector<16x1xf32>
    %274 = vector.broadcast %273 : vector<16x1xf32> to vector<16x128xf32>
    %275 = arith.subf %271, %274 : vector<16x128xf32>
    %276 = math.exp %275 : vector<16x128xf32>
    %cst_94 = arith.constant dense<0.000000e+00> : vector<16xf32>
    %277 = vector.multi_reduction <add>, %276, %cst_94 [1] : vector<16x128xf32> to vector<16xf32>
    %278 = vector.shape_cast %277 : vector<16xf32> to vector<16x1xf32>
    %279 = math.log %278 : vector<16x1xf32>
    %280 = vector.broadcast %279 : vector<16x1xf32> to vector<16x128xf32>
    %281 = arith.subf %275, %280 : vector<16x128xf32>
    %c0_95 = arith.constant 0 : index
    %c0_96 = arith.constant 0 : index
    %282 = vector.load %arg7[%c0_95, %c0_96] : memref<16x128xf32, #tpu.memory_space<vmem>>, vector<16x128xf32>
    tpu.vector_store %arg7[%c0_95, %c0_96], %281 {strides = array<i32>} : memref<16x128xf32, #tpu.memory_space<vmem>>, vector<16x128xf32>,
    return
  }
  func.func @transform_0(%arg0: i32) -> (i32, i32) {
    %c0_i32 = arith.constant 0 : i32
    %c0_i32_0 = arith.constant 0 : i32
    %c0_i32_1 = arith.constant 0 : i32
    return %c0_i32, %c0_i32_0 : i32, i32
  }
  func.func @transform_1(%arg0: i32) -> (i32, i32) {
    %c0_i32 = arith.constant 0 : i32
    %c0_i32_0 = arith.constant 0 : i32
    %c0_i32_1 = arith.constant 0 : i32
    return %c0_i32, %c0_i32_0 : i32, i32
  }
  func.func @transform_2(%arg0: i32) -> (i32, i32) {
    %c0_i32 = arith.constant 0 : i32
    %c0_i32_0 = arith.constant 0 : i32
    %c0_i32_1 = arith.constant 0 : i32
    return %c0_i32, %c0_i32_0 : i32, i32
  }
  func.func @transform_3(%arg0: i32) -> (i32, i32) {
    %c0_i32 = arith.constant 0 : i32
    %c0_i32_0 = arith.constant 0 : i32
    %c0_i32_1 = arith.constant 0 : i32
    return %c0_i32, %c0_i32_0 : i32, i32
  }
  func.func @transform_4(%arg0: i32) -> (i32, i32) {
    %c0_i32 = arith.constant 0 : i32
    %c0_i32_0 = arith.constant 0 : i32
    %c0_i32_1 = arith.constant 0 : i32
    return %c0_i32, %c0_i32_0 : i32, i32
  }
  func.func @transform_5(%arg0: i32) -> (i32, i32) {
    %c0_i32 = arith.constant 0 : i32
    %c0_i32_0 = arith.constant 0 : i32
    %c0_i32_1 = arith.constant 0 : i32
    return %c0_i32, %c0_i32_0 : i32, i32
  }
  func.func @transform_6(%arg0: i32) -> (i32, i32) {
    %c0_i32 = arith.constant 0 : i32
    %c0_i32_0 = arith.constant 0 : i32
    %c0_i32_1 = arith.constant 0 : i32
    return %c0_i32, %c0_i32_0 : i32, i32
  }
}

</mosaic_0001>

<llo_original>
// kernel: tpu_custom_call.1
$region0: #{tpu_custom_call.1}
  #allocation0 [shape = 'u32[]', space=smem, size = 0x4, offset = 0x4, fixed_abs, tag = 'smem constant byte address 0x4 - core index']
  #allocation1 [shape = 'u32[72,128]{1,0:T(1,128)}', space=vmem, size = 0x9000, scoped, tag = 'internal scratch']
  %s0 = inlined_call_operand.vmem [shape: f32[16,8], index: 0, kind: input, shape index: {}]
  %s1 = inlined_call_operand.vmem [shape: bf16[16,16], index: 1, kind: input, shape index: {}]
  %s2 = inlined_call_operand.hbm [shape: bf16[128,256], index: 2, kind: input, shape index: {}]
  %s3 = inlined_call_operand.hbm [shape: bf16[128,128], index: 3, kind: input, shape index: {}]
  %s4 = inlined_call_operand.hbm [shape: bf16[128,256], index: 4, kind: input, shape index: {}]
  %s5 = inlined_call_operand.vmem [shape: f32[3,128], index: 5, kind: input, shape index: {}]
  %s6 = inlined_call_operand.hbm [shape: f32[16,128], index: 6, kind: output, shape index: {}]
  %s7 = sld [smem:[#allocation0]]
  $region46: #{tpu_custom_call.1} parent=0
    _
  %s9 = ssub.s32 1, %s7
  %s10 = scalar_select 0, %s9, %s7
  $region1: #{tpu_custom_call.1} parent=0
    #allocation2 [shape = 'u8[65536]{0}', space=vmem, size = 0x10000, scoped, tag = 'input window, operand 2, single buffered']
    #allocation3 [shape = 's32[1]{0}', space=sflag, size = 0x4, scoped, tag = 'scoped memory for tpu_custom_call.1']
    #allocation4 [shape = 's32[1]{0}', space=sflag, size = 0x4, scoped, tag = 'scoped memory for tpu_custom_call.1']
    #allocation5 [shape = 'u8[32768]{0}', space=vmem, size = 0x8000, scoped, tag = 'input window, operand 3, single buffered']
    #allocation6 [shape = 's32[1]{0}', space=sflag, size = 0x4, scoped, tag = 'scoped memory for tpu_custom_call.1']
    #allocation7 [shape = 'u8[65536]{0}', space=vmem, size = 0x10000, scoped, tag = 'input window, operand 4, single buffered']
    #allocation8 [shape = 'u8[8192]{0}', space=vmem, size = 0x2000, scoped, tag = 'output window, operand 0, single buffered']
    %11 = vsyncpa [#allocation3], 0
    %12 = vsyncpa [#allocation6], 0
    %13 = vsyncpa [#allocation4], 0
    // Predicated region
    $region2: #{tpu_custom_call.1} parent=1 // pred_check
      _
    $region3: #{tpu_custom_call.1} parent=1 // pred_check_branch
      %15 = sbr.rel (0) target = $region5
    $region4: #{tpu_custom_call.1} parent=1 // pred_region
      _
    $region5: #{tpu_custom_call.1} parent=1 // pred_fallthru
      _
    // Predicated region
    $region6: #{tpu_custom_call.1} parent=1 // pred_check
      _
    $region7: #{tpu_custom_call.1} parent=1 // pred_check_branch
      %17 = sbr.rel (0) target = $region9
    $region8: #{tpu_custom_call.1} parent=1 // pred_region
      _
    $region9: #{tpu_custom_call.1} parent=1 // pred_fallthru
      _
    // Predicated region
    $region10: #{tpu_custom_call.1} parent=1 // pred_check
      _
    $region11: #{tpu_custom_call.1} parent=1 // pred_check_branch
      %19 = sbr.rel (0) target = $region13
    $region12: #{tpu_custom_call.1} parent=1 // pred_region
      %21 = vsyncadd [#allocation3], 0
      %s22 = sshll.u32 %s2, 4
      %s23 = int_to_ptr.hbm [resolvable:$true] %s22
      %s24 = sshll.u32 [#allocation2], 4
      %s25 = int_to_ptr.vmem [resolvable:$true] %s24
      %30 = dma.hbm_to_vmem [thread:$0]  %s23, 2048, %s25, [#allocation3], 128, 128, 8
    $region13: #{tpu_custom_call.1} parent=1 // pred_fallthru
      _
    // Predicated region
    $region14: #{tpu_custom_call.1} parent=1 // pred_check
      _
    $region15: #{tpu_custom_call.1} parent=1 // pred_check_branch
      %32 = sbr.rel (0) target = $region17
    $region16: #{tpu_custom_call.1} parent=1 // pred_region
      %34 = vsyncadd [#allocation6], 0
      %s35 = sshll.u32 %s3, 4
      %s36 = int_to_ptr.hbm [resolvable:$true] %s35
      %s37 = sshll.u32 [#allocation5], 4
      %s38 = int_to_ptr.vmem [resolvable:$true] %s37
      %43 = dma.hbm_to_vmem [thread:$0]  %s36, 1024, %s38, [#allocation6], 64, 64, 4
    $region17: #{tpu_custom_call.1} parent=1 // pred_fallthru
      _
    // Predicated region
    $region18: #{tpu_custom_call.1} parent=1 // pred_check
      _
    $region19: #{tpu_custom_call.1} parent=1 // pred_check_branch
      %45 = sbr.rel (0) target = $region21
    $region20: #{tpu_custom_call.1} parent=1 // pred_region
      %47 = vsyncadd [#allocation6], 0
      %s48 = sshll.u32 %s4, 4
      %s49 = int_to_ptr.hbm [resolvable:$true] %s48
      %s50 = sshll.u32 [#allocation7], 4
      %s51 = int_to_ptr.vmem [resolvable:$true] %s50
      %56 = dma.hbm_to_vmem [thread:$0]  %s49, 2048, %s51, [#allocation6], 128, 128, 8
    $region21: #{tpu_custom_call.1} parent=1 // pred_fallthru
      _
    // Predicated region
    $region22: #{tpu_custom_call.1} parent=1 // pred_check
      _
    $region23: #{tpu_custom_call.1} parent=1 // pred_check_branch
      %58 = sbr.rel (0) target = $region25
    $region24: #{tpu_custom_call.1} parent=1 // pred_region
      _
    $region25: #{tpu_custom_call.1} parent=1 // pred_fallthru
      _
    // Predicated region
    $region26: #{tpu_custom_call.1} parent=1 // pred_check
      _
    $region27: #{tpu_custom_call.1} parent=1 // pred_check_branch
      %60 = sbr.rel (0) target = $region29
    $region28: #{tpu_custom_call.1} parent=1 // pred_region
      %62 = dma.done [#allocation3], 2048
    $region29: #{tpu_custom_call.1} parent=1 // pred_fallthru
      _
    // Predicated region
    $region30: #{tpu_custom_call.1} parent=1 // pred_check
      _
    $region31: #{tpu_custom_call.1} parent=1 // pred_check_branch
      %64 = sbr.rel (0) target = $region33
    $region32: #{tpu_custom_call.1} parent=1 // pred_region
      %66 = dma.done [#allocation6], 1024
    $region33: #{tpu_custom_call.1} parent=1 // pred_fallthru
      _
    // Predicated region
    $region34: #{tpu_custom_call.1} parent=1 // pred_check
      _
    $region35: #{tpu_custom_call.1} parent=1 // pred_check_branch
      %68 = sbr.rel (0) target = $region37
    $region36: #{tpu_custom_call.1} parent=1 // pred_region
      %70 = dma.done [#allocation6], 2048
    $region37: #{tpu_custom_call.1} parent=1 // pred_fallthru
      _
    %v72 = vld [vmem:[%s1] sm:$0xf]
    %v73 = vld [vmem:[%s1 + $0x4] sm:$0xf]
    %v74 = vld [vmem:[%s5] sm:$0x7]
    %v75 = vld [vmem:[%s0] sm:$0xff]
    %v76 = vld [vmem:[%s0 + $0x8] sm:$0xff]
    %v77 = vpack.c.bf16 %v75, %v75
    %v78 = vpack.c.bf16 %v76, %v76
    %v81 = vunpack.c.l.b16 %v77
    %v82 = vunpack.c.l.b16 %v78
    %v83 = vpack.c.b16 %v82, %v81
    %vm84 = vcmask 64512
    %v87 = vsel %vm84, %v83, 0
    %v89 = vld [vmem:[#allocation2] sm:$0xff]
    %v90 = vld [vmem:[#allocation2 + $0x8] sm:$0xff]
    %v91 = vld [vmem:[#allocation2 + $0x10] sm:$0xff]
    %v92 = vld [vmem:[#allocation2 + $0x18] sm:$0xff]
    %v93 = vld [vmem:[#allocation2 + $0x20] sm:$0xff]
    %v94 = vld [vmem:[#allocation2 + $0x28] sm:$0xff]
    %v95 = vld [vmem:[#allocation2 + $0x30] sm:$0xff]
    %v96 = vld [vmem:[#allocation2 + $0x38] sm:$0xff]
    %v97 = vld [vmem:[#allocation2 + $0x40] sm:$0xff]
    %v98 = vld [vmem:[#allocation2 + $0x48] sm:$0xff]
    %v99 = vld [vmem:[#allocation2 + $0x50] sm:$0xff]
    %v100 = vld [vmem:[#allocation2 + $0x58] sm:$0xff]
    %v101 = vld [vmem:[#allocation2 + $0x60] sm:$0xff]
    %v102 = vld [vmem:[#allocation2 + $0x68] sm:$0xff]
    %v103 = vld [vmem:[#allocation2 + $0x70] sm:$0xff]
    %v104 = vld [vmem:[#allocation2 + $0x78] sm:$0xff]
    %v121 = vunpack.c.l.b16 %v89
    %v122 = vunpack.c.h.b16 %v89
    %v123 = vunpack.c.l.b16 %v90
    %v124 = vunpack.c.h.b16 %v90
    %v125 = vunpack.c.l.b16 %v91
    %v126 = vunpack.c.h.b16 %v91
    %v127 = vunpack.c.l.b16 %v92
    %v128 = vunpack.c.h.b16 %v92
    %v129 = vunpack.c.l.b16 %v93
    %v130 = vunpack.c.h.b16 %v93
    %v131 = vunpack.c.l.b16 %v94
    %v132 = vunpack.c.h.b16 %v94
    %v133 = vunpack.c.l.b16 %v95
    %v134 = vunpack.c.h.b16 %v95
    %v135 = vunpack.c.l.b16 %v96
    %v136 = vunpack.c.h.b16 %v96
    %v137 = vunpack.c.l.b16 %v97
    %v138 = vunpack.c.h.b16 %v97
    %v139 = vunpack.c.l.b16 %v98
    %v140 = vunpack.c.h.b16 %v98
    %v141 = vunpack.c.l.b16 %v99
    %v142 = vunpack.c.h.b16 %v99
    %v143 = vunpack.c.l.b16 %v100
    %v144 = vunpack.c.h.b16 %v100
    %v145 = vunpack.c.l.b16 %v101
    %v146 = vunpack.c.h.b16 %v101
    %v147 = vunpack.c.l.b16 %v102
    %v148 = vunpack.c.h.b16 %v102
    %v149 = vunpack.c.l.b16 %v103
    %v150 = vunpack.c.h.b16 %v103
    %v151 = vunpack.c.l.b16 %v104
    %v152 = vunpack.c.h.b16 %v104
    %v153 = vpack.c.b16 %v123, %v121
    %v154 = vpack.c.b16 %v124, %v122
    %v155 = vpack.c.b16 %v127, %v125
    %v156 = vpack.c.b16 %v128, %v126
    %v157 = vpack.c.b16 %v131, %v129
    %v158 = vpack.c.b16 %v132, %v130
    %v159 = vpack.c.b16 %v135, %v133
    %v160 = vpack.c.b16 %v136, %v134
    %v161 = vpack.c.b16 %v139, %v137
    %v162 = vpack.c.b16 %v140, %v138
    %v163 = vpack.c.b16 %v143, %v141
    %v164 = vpack.c.b16 %v144, %v142
    %v165 = vpack.c.b16 %v147, %v145
    %v166 = vpack.c.b16 %v148, %v146
    %v167 = vpack.c.b16 %v151, %v149
    %v168 = vpack.c.b16 %v152, %v150
    %185 = vmatpush.bf16.msra.mxu0 %v167
    %186 = vmatpush.bf16.msra.mxu0 %v165
    %187 = vmatpush.bf16.msra.mxu0 %v163
    %188 = vmatpush.bf16.msra.mxu0 %v161
    %189 = vmatpush.bf16.msra.mxu0 %v159
    %190 = vmatpush.bf16.msra.mxu0 %v157
    %191 = vmatpush.bf16.msra.mxu0 %v155
    %192 = vmatpush.bf16.msra.mxu0 %v153
    %193 = vmatmul.bf16.gmra.mxu0 %v87
    %v194 = vpop.f32.mrf.mxu0
    %v195 = vadd.f32 0.0, %v194
    %v196 = vpop.f32.mrf.mxu0
    %v197 = vadd.f32 0.0, %v196
    %198 = vdwg.mxu0
    %199 = vmatpush.bf16.msra.mxu0 %v168
    %200 = vmatpush.bf16.msra.mxu0 %v166
    %201 = vmatpush.bf16.msra.mxu0 %v164
    %202 = vmatpush.bf16.msra.mxu0 %v162
    %203 = vmatpush.bf16.msra.mxu0 %v160
    %204 = vmatpush.bf16.msra.mxu0 %v158
    %205 = vmatpush.bf16.msra.mxu0 %v156
    %206 = vmatpush.bf16.msra.mxu0 %v154
    %207 = vmatmul.bf16.gmra.mxu0 %v87
    %v208 = vpop.f32.mrf.mxu0
    %v209 = vadd.f32 0.0, %v208
    %v210 = vpop.f32.mrf.mxu0
    %v211 = vadd.f32 0.0, %v210
    %212 = vdwg.mxu0
    %v213 = vmax.f32 %v195, -1.4707963
    %v214 = vmax.f32 %v197, -1.4707963
    %v215 = vmin.f32 %v213, 1.4707963
    %v216 = vmin.f32 %v214, 1.4707963
    %v217 = vpack.c.bf16 %v211, %v209
    %v220 = vunpack.c.l.b16 %v72
    %v221 = vunpack.c.l.b16 %v73
    %v222 = vpack.c.b16 %v221, %v220
    %vm223 = vcmask 130048
    %v225 = vsel %vm223, %v222, 0
    %227 = vmatpush.bf16.msra.mxu0 0
    %228 = vmatpush.bf16.msra.mxu0 0
    %229 = vmatpush.bf16.msra.mxu0 0
    %230 = vmatpush.bf16.msra.mxu0 0
    %231 = vmatpush.bf16.msra.mxu0 0
    %232 = vmatpush.bf16.msra.mxu0 0
    %233 = vmatpush.bf16.msra.mxu0 0
    %234 = vmatpush.bf16.msra.mxu0 %v217
    %235 = vmatmul.bf16.gmra.mxu0 %v225
    %v236 = vpop.f32.mrf.mxu0
    %v237 = vadd.f32 0.0, %v236
    %v238 = vpop.f32.mrf.mxu0
    %v239 = vadd.f32 0.0, %v238
    %240 = vdwg.mxu0
    %v241 = vmul.f32 %v215, %v215
    %v242 = vmul.f32 %v216, %v216
    %v243 = vmul.f32 %v241, %v241
    %v244 = vmul.f32 %v242, %v242
    %v245 = vmul.f32 %v241, -0.16666667
    %v246 = vmul.f32 %v242, -0.16666667
    %v247 = vadd.f32 %v245, 1.0
    %v248 = vadd.f32 %v246, 1.0
    %v249 = vmul.f32 %v241, -0.0001984127
    %v250 = vmul.f32 %v242, -0.0001984127
    %v251 = vadd.f32 %v249, 0.008333334
    %v252 = vadd.f32 %v250, 0.008333334
    %v253 = vmul.f32 %v241, -2.5052108e-08
    %v254 = vmul.f32 %v242, -2.5052108e-08
    %v255 = vadd.f32 %v253, 2.7557319e-06
    %v256 = vadd.f32 %v254, 2.7557319e-06
    %v257 = vmul.f32 %v243, %v255
    %v258 = vmul.f32 %v244, %v256
    %v259 = vadd.f32 %v251, %v257
    %v260 = vadd.f32 %v252, %v258
    %v261 = vmul.f32 %v243, %v259
    %v262 = vmul.f32 %v244, %v260
    %v263 = vadd.f32 %v247, %v261
    %v264 = vadd.f32 %v248, %v262
    %v265 = vmul.f32 %v241, -0.5
    %v266 = vmul.f32 %v242, -0.5
    %v267 = vadd.f32 %v265, 1.0
    %v268 = vadd.f32 %v266, 1.0
    %v269 = vmul.f32 %v241, -0.0013888889
    %v270 = vmul.f32 %v242, -0.0013888889
    %v271 = vadd.f32 %v269, 0.041666668
    %v272 = vadd.f32 %v270, 0.041666668
    %v273 = vmul.f32 %v241, -2.755732e-07
    %v274 = vmul.f32 %v242, -2.755732e-07
    %v275 = vadd.f32 %v273, 2.4801588e-05
    %v276 = vadd.f32 %v274, 2.4801588e-05
    %v277 = vmul.f32 %v243, %v275
    %v278 = vmul.f32 %v244, %v276
    %v279 = vadd.f32 %v271, %v277
    %v280 = vadd.f32 %v272, %v278
    %v281 = vmul.f32 %v243, %v279
    %v282 = vmul.f32 %v244, %v280
    %v283 = vadd.f32 %v267, %v281
    %v284 = vadd.f32 %v268, %v282
    %v285 = vmul.f32 %v215, %v263
    %v286 = vmul.f32 %v216, %v264
    %v287 = vrcp.pop %v283
    %v288 = vrcp.pop %v284
    %v289 = vmul.f32 %v283, %v287
    %v290 = vmul.f32 %v284, %v288
    %v291 = vsub.f32 2.0, %v289
    %v292 = vsub.f32 2.0, %v290
    %v293 = vmul.f32 %v287, %v291
    %v294 = vmul.f32 %v288, %v292
    %v295 = vmul.f32 %v285, %v293
    %v296 = vmul.f32 %v286, %v294
    %v297 = vadd.f32 %v295, %v209
    %v298 = vadd.f32 %v296, %v211
    %v299 = vadd.f32 %v297, %v237
    %v300 = vadd.f32 %v298, %v239
    %v301 = vperm.slane %v74, 0
    %v302 = vadd.f32 %v299, %v301
    %v303 = vadd.f32 %v300, %v301
    %v304 = vand.u32 2147483647, %v302
    %v305 = vand.u32 2147483647, %v303
    %vm306 = vcmp.gt.f32.partialorder %v304, 1.0
    %vm307 = vcmp.gt.f32.partialorder %v305, 1.0
    %v308 = vmax.f32 %v304, 1.0
    %v309 = vmax.f32 %v305, 1.0
    %v310 = vrcp.pop %v308
    %v311 = vrcp.pop %v309
    %v312 = vsel %vm306, %v310, %v304
    %v313 = vsel %vm307, %v311, %v305
    %v314 = vmul.f32 %v312, %v312
    %v315 = vmul.f32 %v313, %v313
    %v316 = vmul.f32 %v314, %v314
    %v317 = vmul.f32 %v315, %v315
    %v318 = vmul.f32 %v314, -0.3302995
    %v319 = vmul.f32 %v315, -0.3302995
    %v320 = vadd.f32 %v318, 0.999866
    %v321 = vadd.f32 %v319, 0.999866
    %v322 = vmul.f32 %v314, -0.085133
    %v323 = vmul.f32 %v315, -0.085133
    %v324 = vadd.f32 %v322, 0.180141
    %v325 = vadd.f32 %v323, 0.180141
    %v326 = vmul.f32 %v316, 0.0208351
    %v327 = vmul.f32 %v317, 0.0208351
    %v328 = vadd.f32 %v324, %v326
    %v329 = vadd.f32 %v325, %v327
    %v330 = vmul.f32 %v316, %v328
    %v331 = vmul.f32 %v317, %v329
    %v332 = vadd.f32 %v320, %v330
    %v333 = vadd.f32 %v321, %v331
    %v334 = vmul.f32 %v312, %v332
    %v335 = vmul.f32 %v313, %v333
    %v336 = vsub.f32 1.5707964, %v334
    %v337 = vsub.f32 1.5707964, %v335
    %v338 = vsel %vm306, %v336, %v334
    %v339 = vsel %vm307, %v337, %v335
    %vm340 = vcmp.lt.f32.partialorder %v302, 0.0
    %vm341 = vcmp.lt.f32.partialorder %v303, 0.0
    %v342 = vsub.f32 0.0, %v338
    %v343 = vsub.f32 0.0, %v339
    %v344 = vsel %vm340, %v342, %v338
    %v345 = vsel %vm341, %v343, %v339
    %v346 = vmax.f32 %v344, -1.4707963
    %v347 = vmax.f32 %v345, -1.4707963
    %v348 = vmin.f32 %v346, 1.4707963
    %v349 = vmin.f32 %v347, 1.4707963
    %v350 = vpack.c.bf16 %v345, %v344
    %v351 = vld [vmem:[#allocation5] sm:$0xf]
    %v352 = vld [vmem:[#allocation5 + $0x4] sm:$0xf]
    %v353 = vld [vmem:[#allocation5 + $0x8] sm:$0xf]
    %v354 = vld [vmem:[#allocation5 + $0xc] sm:$0xf]
    %v355 = vld [vmem:[#allocation5 + $0x10] sm:$0xf]
    %v356 = vld [vmem:[#allocation5 + $0x14] sm:$0xf]
    %v357 = vld [vmem:[#allocation5 + $0x18] sm:$0xf]
    %v358 = vld [vmem:[#allocation5 + $0x1c] sm:$0xf]
    %v359 = vld [vmem:[#allocation5 + $0x20] sm:$0xf]
    %v360 = vld [vmem:[#allocation5 + $0x24] sm:$0xf]
    %v361 = vld [vmem:[#allocation5 + $0x28] sm:$0xf]
    %v362 = vld [vmem:[#allocation5 + $0x2c] sm:$0xf]
    %v363 = vld [vmem:[#allocation5 + $0x30] sm:$0xf]
    %v364 = vld [vmem:[#allocation5 + $0x34] sm:$0xf]
    %v365 = vld [vmem:[#allocation5 + $0x38] sm:$0xf]
    %v366 = vld [vmem:[#allocation5 + $0x3c] sm:$0xf]
    %v383 = vunpack.c.l.b16 %v351
    %v384 = vunpack.c.l.b16 %v352
    %v385 = vunpack.c.l.b16 %v353
    %v386 = vunpack.c.l.b16 %v354
    %v387 = vunpack.c.l.b16 %v355
    %v388 = vunpack.c.l.b16 %v356
    %v389 = vunpack.c.l.b16 %v357
    %v390 = vunpack.c.l.b16 %v358
    %v391 = vunpack.c.l.b16 %v359
    %v392 = vunpack.c.l.b16 %v360
    %v393 = vunpack.c.l.b16 %v361
    %v394 = vunpack.c.l.b16 %v362
    %v395 = vunpack.c.l.b16 %v363
    %v396 = vunpack.c.l.b16 %v364
    %v397 = vunpack.c.l.b16 %v365
    %v398 = vunpack.c.l.b16 %v366
    %v399 = vpack.c.b16 %v384, %v383
    %v400 = vpack.c.b16 %v386, %v385
    %v401 = vpack.c.b16 %v388, %v387
    %v402 = vpack.c.b16 %v390, %v389
    %v403 = vpack.c.b16 %v392, %v391
    %v404 = vpack.c.b16 %v394, %v393
    %v405 = vpack.c.b16 %v396, %v395
    %v406 = vpack.c.b16 %v398, %v397
    %415 = vmatpush.bf16.msra.mxu0 %v406
    %416 = vmatpush.bf16.msra.mxu0 %v405
    %417 = vmatpush.bf16.msra.mxu0 %v404
    %418 = vmatpush.bf16.msra.mxu0 %v403
    %419 = vmatpush.bf16.msra.mxu0 %v402
    %420 = vmatpush.bf16.msra.mxu0 %v401
    %421 = vmatpush.bf16.msra.mxu0 %v400
    %422 = vmatpush.bf16.msra.mxu0 %v399
    %423 = vmatmul.bf16.gmra.mxu0 %v350
    %v424 = vpop.f32.mrf.mxu0
    %v425 = vadd.f32 0.0, %v424
    %v426 = vpop.f32.mrf.mxu0
    %v427 = vadd.f32 0.0, %v426
    %428 = vdwg.mxu0
    %v429 = vpack.c.bf16 %v427, %v425
    %430 = vmatpush.bf16.msra.mxu0 0
    %431 = vmatpush.bf16.msra.mxu0 0
    %432 = vmatpush.bf16.msra.mxu0 0
    %433 = vmatpush.bf16.msra.mxu0 0
    %434 = vmatpush.bf16.msra.mxu0 0
    %435 = vmatpush.bf16.msra.mxu0 0
    %436 = vmatpush.bf16.msra.mxu0 0
    %437 = vmatpush.bf16.msra.mxu0 %v429
    %438 = vmatmul.bf16.gmra.mxu0 %v225
    %v439 = vpop.f32.mrf.mxu0
    %v440 = vadd.f32 0.0, %v439
    %v441 = vpop.f32.mrf.mxu0
    %v442 = vadd.f32 0.0, %v441
    %443 = vdwg.mxu0
    %v444 = vmul.f32 %v348, %v348
    %v445 = vmul.f32 %v349, %v349
    %v446 = vmul.f32 %v444, %v444
    %v447 = vmul.f32 %v445, %v445
    %v448 = vmul.f32 %v444, -0.16666667
    %v449 = vmul.f32 %v445, -0.16666667
    %v450 = vadd.f32 %v448, 1.0
    %v451 = vadd.f32 %v449, 1.0
    %v452 = vmul.f32 %v444, -0.0001984127
    %v453 = vmul.f32 %v445, -0.0001984127
    %v454 = vadd.f32 %v452, 0.008333334
    %v455 = vadd.f32 %v453, 0.008333334
    %v456 = vmul.f32 %v444, -2.5052108e-08
    %v457 = vmul.f32 %v445, -2.5052108e-08
    %v458 = vadd.f32 %v456, 2.7557319e-06
    %v459 = vadd.f32 %v457, 2.7557319e-06
    %v460 = vmul.f32 %v446, %v458
    %v461 = vmul.f32 %v447, %v459
    %v462 = vadd.f32 %v454, %v460
    %v463 = vadd.f32 %v455, %v461
    %v464 = vmul.f32 %v446, %v462
    %v465 = vmul.f32 %v447, %v463
    %v466 = vadd.f32 %v450, %v464
    %v467 = vadd.f32 %v451, %v465
    %v468 = vmul.f32 %v444, -0.5
    %v469 = vmul.f32 %v445, -0.5
    %v470 = vadd.f32 %v468, 1.0
    %v471 = vadd.f32 %v469, 1.0
    %v472 = vmul.f32 %v444, -0.0013888889
    %v473 = vmul.f32 %v445, -0.0013888889
    %v474 = vadd.f32 %v472, 0.041666668
    %v475 = vadd.f32 %v473, 0.041666668
    %v476 = vmul.f32 %v444, -2.755732e-07
    %v477 = vmul.f32 %v445, -2.755732e-07
    %v478 = vadd.f32 %v476, 2.4801588e-05
    %v479 = vadd.f32 %v477, 2.4801588e-05
    %v480 = vmul.f32 %v446, %v478
    %v481 = vmul.f32 %v447, %v479
    %v482 = vadd.f32 %v474, %v480
    %v483 = vadd.f32 %v475, %v481
    %v484 = vmul.f32 %v446, %v482
    %v485 = vmul.f32 %v447, %v483
    %v486 = vadd.f32 %v470, %v484
    %v487 = vadd.f32 %v471, %v485
    %v488 = vmul.f32 %v348, %v466
    %v489 = vmul.f32 %v349, %v467
    %v490 = vrcp.pop %v486
    %v491 = vrcp.pop %v487
    %v492 = vmul.f32 %v486, %v490
    %v493 = vmul.f32 %v487, %v491
    %v494 = vsub.f32 2.0, %v492
    %v495 = vsub.f32 2.0, %v493
    %v496 = vmul.f32 %v490, %v494
    %v497 = vmul.f32 %v491, %v495
    %v498 = vmul.f32 %v488, %v496
    %v499 = vmul.f32 %v489, %v497
    %v500 = vadd.f32 %v498, %v425
    %v501 = vadd.f32 %v499, %v427
    %v502 = vadd.f32 %v500, %v440
    %v503 = vadd.f32 %v501, %v442
    %v504 = vperm.slane %v74, 1
    %v505 = vadd.f32 %v502, %v504
    %v506 = vadd.f32 %v503, %v504
    %v507 = vand.u32 2147483647, %v505
    %v508 = vand.u32 2147483647, %v506
    %vm509 = vcmp.gt.f32.partialorder %v507, 1.0
    %vm510 = vcmp.gt.f32.partialorder %v508, 1.0
    %v511 = vmax.f32 %v507, 1.0
    %v512 = vmax.f32 %v508, 1.0
    %v513 = vrcp.pop %v511
    %v514 = vrcp.pop %v512
    %v515 = vsel %vm509, %v513, %v507
    %v516 = vsel %vm510, %v514, %v508
    %v517 = vmul.f32 %v515, %v515
    %v518 = vmul.f32 %v516, %v516
    %v519 = vmul.f32 %v517, %v517
    %v520 = vmul.f32 %v518, %v518
    %v521 = vmul.f32 %v517, -0.3302995
    %v522 = vmul.f32 %v518, -0.3302995
    %v523 = vadd.f32 %v521, 0.999866
    %v524 = vadd.f32 %v522, 0.999866
    %v525 = vmul.f32 %v517, -0.085133
    %v526 = vmul.f32 %v518, -0.085133
    %v527 = vadd.f32 %v525, 0.180141
    %v528 = vadd.f32 %v526, 0.180141
    %v529 = vmul.f32 %v519, 0.0208351
    %v530 = vmul.f32 %v520, 0.0208351
    %v531 = vadd.f32 %v527, %v529
    %v532 = vadd.f32 %v528, %v530
    %v533 = vmul.f32 %v519, %v531
    %v534 = vmul.f32 %v520, %v532
    %v535 = vadd.f32 %v523, %v533
    %v536 = vadd.f32 %v524, %v534
    %v537 = vmul.f32 %v515, %v535
    %v538 = vmul.f32 %v516, %v536
    %v539 = vsub.f32 1.5707964, %v537
    %v540 = vsub.f32 1.5707964, %v538
    %v541 = vsel %vm509, %v539, %v537
    %v542 = vsel %vm510, %v540, %v538
    %vm543 = vcmp.lt.f32.partialorder %v505, 0.0
    %vm544 = vcmp.lt.f32.partialorder %v506, 0.0
    %v545 = vsub.f32 0.0, %v541
    %v546 = vsub.f32 0.0, %v542
    %v547 = vsel %vm543, %v545, %v541
    %v548 = vsel %vm544, %v546, %v542
    %v549 = vpack.c.bf16 %v548, %v547
    %v550 = vld [vmem:[#allocation7] sm:$0xff]
    %v551 = vld [vmem:[#allocation7 + $0x8] sm:$0xff]
    %v552 = vld [vmem:[#allocation7 + $0x10] sm:$0xff]
    %v553 = vld [vmem:[#allocation7 + $0x18] sm:$0xff]
    %v554 = vld [vmem:[#allocation7 + $0x20] sm:$0xff]
    %v555 = vld [vmem:[#allocation7 + $0x28] sm:$0xff]
    %v556 = vld [vmem:[#allocation7 + $0x30] sm:$0xff]
    %v557 = vld [vmem:[#allocation7 + $0x38] sm:$0xff]
    %v558 = vld [vmem:[#allocation7 + $0x40] sm:$0xff]
    %v559 = vld [vmem:[#allocation7 + $0x48] sm:$0xff]
    %v560 = vld [vmem:[#allocation7 + $0x50] sm:$0xff]
    %v561 = vld [vmem:[#allocation7 + $0x58] sm:$0xff]
    %v562 = vld [vmem:[#allocation7 + $0x60] sm:$0xff]
    %v563 = vld [vmem:[#allocation7 + $0x68] sm:$0xff]
    %v564 = vld [vmem:[#allocation7 + $0x70] sm:$0xff]
    %v565 = vld [vmem:[#allocation7 + $0x78] sm:$0xff]
    %v582 = vunpack.c.l.b16 %v550
    %v583 = vunpack.c.h.b16 %v550
    %v584 = vunpack.c.l.b16 %v551
    %v585 = vunpack.c.h.b16 %v551
    %v586 = vunpack.c.l.b16 %v552
    %v587 = vunpack.c.h.b16 %v552
    %v588 = vunpack.c.l.b16 %v553
    %v589 = vunpack.c.h.b16 %v553
    %v590 = vunpack.c.l.b16 %v554
    %v591 = vunpack.c.h.b16 %v554
    %v592 = vunpack.c.l.b16 %v555
    %v593 = vunpack.c.h.b16 %v555
    %v594 = vunpack.c.l.b16 %v556
    %v595 = vunpack.c.h.b16 %v556
    %v596 = vunpack.c.l.b16 %v557
    %v597 = vunpack.c.h.b16 %v557
    %v598 = vunpack.c.l.b16 %v558
    %v599 = vunpack.c.h.b16 %v558
    %v600 = vunpack.c.l.b16 %v559
    %v601 = vunpack.c.h.b16 %v559
    %v602 = vunpack.c.l.b16 %v560
    %v603 = vunpack.c.h.b16 %v560
    %v604 = vunpack.c.l.b16 %v561
    %v605 = vunpack.c.h.b16 %v561
    %v606 = vunpack.c.l.b16 %v562
    %v607 = vunpack.c.h.b16 %v562
    %v608 = vunpack.c.l.b16 %v563
    %v609 = vunpack.c.h.b16 %v563
    %v610 = vunpack.c.l.b16 %v564
    %v611 = vunpack.c.h.b16 %v564
    %v612 = vunpack.c.l.b16 %v565
    %v613 = vunpack.c.h.b16 %v565
    %v614 = vpack.c.b16 %v584, %v582
    %v615 = vpack.c.b16 %v585, %v583
    %v616 = vpack.c.b16 %v588, %v586
    %v617 = vpack.c.b16 %v589, %v587
    %v618 = vpack.c.b16 %v592, %v590
    %v619 = vpack.c.b16 %v593, %v591
    %v620 = vpack.c.b16 %v596, %v594
    %v621 = vpack.c.b16 %v597, %v595
    %v622 = vpack.c.b16 %v600, %v598
    %v623 = vpack.c.b16 %v601, %v599
    %v624 = vpack.c.b16 %v604, %v602
    %v625 = vpack.c.b16 %v605, %v603
    %v626 = vpack.c.b16 %v608, %v606
    %v627 = vpack.c.b16 %v609, %v607
    %v628 = vpack.c.b16 %v612, %v610
    %v629 = vpack.c.b16 %v613, %v611
    %646 = vmatpush.bf16.msra.mxu0 %v628
    %647 = vmatpush.bf16.msra.mxu0 %v626
    %648 = vmatpush.bf16.msra.mxu0 %v624
    %649 = vmatpush.bf16.msra.mxu0 %v622
    %650 = vmatpush.bf16.msra.mxu0 %v620
    %651 = vmatpush.bf16.msra.mxu0 %v618
    %652 = vmatpush.bf16.msra.mxu0 %v616
    %653 = vmatpush.bf16.msra.mxu0 %v614
    %654 = vmatmul.bf16.gmra.mxu0 %v549
    %v655 = vpop.f32.mrf.mxu0
    %v656 = vadd.f32 0.0, %v655
    %v657 = vpop.f32.mrf.mxu0
    %v658 = vadd.f32 0.0, %v657
    %659 = vdwg.mxu0
    %660 = vmatpush.bf16.msra.mxu0 %v629
    %661 = vmatpush.bf16.msra.mxu0 %v627
    %662 = vmatpush.bf16.msra.mxu0 %v625
    %663 = vmatpush.bf16.msra.mxu0 %v623
    %664 = vmatpush.bf16.msra.mxu0 %v621
    %665 = vmatpush.bf16.msra.mxu0 %v619
    %666 = vmatpush.bf16.msra.mxu0 %v617
    %667 = vmatpush.bf16.msra.mxu0 %v615
    %668 = vmatmul.bf16.gmra.mxu0 %v549
    %v669 = vpop.f32.mrf.mxu0
    %v670 = vadd.f32 0.0, %v669
    %v671 = vpop.f32.mrf.mxu0
    %v672 = vadd.f32 0.0, %v671
    %673 = vdwg.mxu0
    %v674 = vmax.f32 %v656, -1.4707963
    %v675 = vmax.f32 %v658, -1.4707963
    %v676 = vmin.f32 %v674, 1.4707963
    %v677 = vmin.f32 %v675, 1.4707963
    %v678 = vpack.c.bf16 %v672, %v670
    %679 = vmatpush.bf16.msra.mxu0 0
    %680 = vmatpush.bf16.msra.mxu0 0
    %681 = vmatpush.bf16.msra.mxu0 0
    %682 = vmatpush.bf16.msra.mxu0 0
    %683 = vmatpush.bf16.msra.mxu0 0
    %684 = vmatpush.bf16.msra.mxu0 0
    %685 = vmatpush.bf16.msra.mxu0 0
    %686 = vmatpush.bf16.msra.mxu0 %v678
    %687 = vmatmul.bf16.gmra.mxu0 %v225
    %v688 = vpop.f32.mrf.mxu0
    %v689 = vadd.f32 0.0, %v688
    %v690 = vpop.f32.mrf.mxu0
    %v691 = vadd.f32 0.0, %v690
    %692 = vdwg.mxu0
    %v693 = vmul.f32 %v676, %v676
    %v694 = vmul.f32 %v677, %v677
    %v695 = vmul.f32 %v693, %v693
    %v696 = vmul.f32 %v694, %v694
    %v697 = vmul.f32 %v693, -0.16666667
    %v698 = vmul.f32 %v694, -0.16666667
    %v699 = vadd.f32 %v697, 1.0
    %v700 = vadd.f32 %v698, 1.0
    %v701 = vmul.f32 %v693, -0.0001984127
    %v702 = vmul.f32 %v694, -0.0001984127
    %v703 = vadd.f32 %v701, 0.008333334
    %v704 = vadd.f32 %v702, 0.008333334
    %v705 = vmul.f32 %v693, -2.5052108e-08
    %v706 = vmul.f32 %v694, -2.5052108e-08
    %v707 = vadd.f32 %v705, 2.7557319e-06
    %v708 = vadd.f32 %v706, 2.7557319e-06
    %v709 = vmul.f32 %v695, %v707
    %v710 = vmul.f32 %v696, %v708
    %v711 = vadd.f32 %v703, %v709
    %v712 = vadd.f32 %v704, %v710
    %v713 = vmul.f32 %v695, %v711
    %v714 = vmul.f32 %v696, %v712
    %v715 = vadd.f32 %v699, %v713
    %v716 = vadd.f32 %v700, %v714
    %v717 = vmul.f32 %v693, -0.5
    %v718 = vmul.f32 %v694, -0.5
    %v719 = vadd.f32 %v717, 1.0
    %v720 = vadd.f32 %v718, 1.0
    %v721 = vmul.f32 %v693, -0.0013888889
    %v722 = vmul.f32 %v694, -0.0013888889
    %v723 = vadd.f32 %v721, 0.041666668
    %v724 = vadd.f32 %v722, 0.041666668
    %v725 = vmul.f32 %v693, -2.755732e-07
    %v726 = vmul.f32 %v694, -2.755732e-07
    %v727 = vadd.f32 %v725, 2.4801588e-05
    %v728 = vadd.f32 %v726, 2.4801588e-05
    %v729 = vmul.f32 %v695, %v727
    %v730 = vmul.f32 %v696, %v728
    %v731 = vadd.f32 %v723, %v729
    %v732 = vadd.f32 %v724, %v730
    %v733 = vmul.f32 %v695, %v731
    %v734 = vmul.f32 %v696, %v732
    %v735 = vadd.f32 %v719, %v733
    %v736 = vadd.f32 %v720, %v734
    %v737 = vmul.f32 %v676, %v715
    %v738 = vmul.f32 %v677, %v716
    %v739 = vrcp.pop %v735
    %v740 = vrcp.pop %v736
    %v741 = vmul.f32 %v735, %v739
    %v742 = vmul.f32 %v736, %v740
    %v743 = vsub.f32 2.0, %v741
    %v744 = vsub.f32 2.0, %v742
    %v745 = vmul.f32 %v739, %v743
    %v746 = vmul.f32 %v740, %v744
    %v747 = vmul.f32 %v737, %v745
    %v748 = vmul.f32 %v738, %v746
    %v749 = vadd.f32 %v747, %v670
    %v750 = vadd.f32 %v748, %v672
    %v751 = vadd.f32 %v749, %v689
    %v752 = vadd.f32 %v750, %v691
    %v753 = vperm.slane %v74, 2
    %v754 = vadd.f32 %v751, %v753
    %v755 = vadd.f32 %v752, %v753
    %v756 = vand.u32 2147483647, %v754
    %v757 = vand.u32 2147483647, %v755
    %vm758 = vcmp.gt.f32.partialorder %v756, 1.0
    %vm759 = vcmp.gt.f32.partialorder %v757, 1.0
    %v760 = vmax.f32 %v756, 1.0
    %v761 = vmax.f32 %v757, 1.0
    %v762 = vrcp.pop %v760
    %v763 = vrcp.pop %v761
    %v764 = vsel %vm758, %v762, %v756
    %v765 = vsel %vm759, %v763, %v757
    %v766 = vmul.f32 %v764, %v764
    %v767 = vmul.f32 %v765, %v765
    %v768 = vmul.f32 %v766, %v766
    %v769 = vmul.f32 %v767, %v767
    %v770 = vmul.f32 %v766, -0.3302995
    %v771 = vmul.f32 %v767, -0.3302995
    %v772 = vadd.f32 %v770, 0.999866
    %v773 = vadd.f32 %v771, 0.999866
    %v774 = vmul.f32 %v766, -0.085133
    %v775 = vmul.f32 %v767, -0.085133
    %v776 = vadd.f32 %v774, 0.180141
    %v777 = vadd.f32 %v775, 0.180141
    %v778 = vmul.f32 %v768, 0.0208351
    %v779 = vmul.f32 %v769, 0.0208351
    %v780 = vadd.f32 %v776, %v778
    %v781 = vadd.f32 %v777, %v779
    %v782 = vmul.f32 %v768, %v780
    %v783 = vmul.f32 %v769, %v781
    %v784 = vadd.f32 %v772, %v782
    %v785 = vadd.f32 %v773, %v783
    %v786 = vmul.f32 %v764, %v784
    %v787 = vmul.f32 %v765, %v785
    %v788 = vsub.f32 1.5707964, %v786
    %v789 = vsub.f32 1.5707964, %v787
    %v790 = vsel %vm758, %v788, %v786
    %v791 = vsel %vm759, %v789, %v787
    %vm792 = vcmp.lt.f32.partialorder %v754, 0.0
    %vm793 = vcmp.lt.f32.partialorder %v755, 0.0
    %v794 = vsub.f32 0.0, %v790
    %v795 = vsub.f32 0.0, %v791
    %v796 = vsel %vm792, %v794, %v790
    %v797 = vsel %vm793, %v795, %v791
    %v798 = vlaneseq
    %v799 = vand.u32 %v798, 127
    %vm800 = vcmp.lt.s32.totalorder %v799, 4
    %v801 = vsel %vm800, %v796, -1e+30
    %v802 = vsel %vm800, %v797, -1e+30
    %803 = vmax.xlane.f32.xlu0 %v801
    %v804 = vpop.xlane.xlu0 %803
    %805 = vmax.xlane.f32.xlu0 %v802
    %v806 = vpop.xlane.xlu0 %805
    %v807 = vsub.f32 %v801, %v804
    %v808 = vsub.f32 %v802, %v806
    %v809 = vmul.f32 %v807, 1.442695
    %v810 = vpow.pop %v809
    %v811 = vmul.f32 %v808, 1.442695
    %v812 = vpow.pop %v811
    %813 = vadd.xlane.f32.xlu0 %v810
    %v814 = vpop.xlane.xlu0 %813
    %815 = vadd.xlane.f32.xlu0 %v812
    %v816 = vpop.xlane.xlu0 %815
    %v817 = vlog2.pop %v814
    %v818 = vmul.f32 %v817, 0.6931472
    %v819 = vlog2.pop %v816
    %v820 = vmul.f32 %v819, 0.6931472
    %v821 = vsub.f32 %v807, %v818
    %v822 = vsub.f32 %v808, %v820
    %823 = vst [vmem:[#allocation8] sm:$0xff] %v821
    %824 = vst [vmem:[#allocation8 + $0x8] sm:$0xff] %v822
    // Predicated region
    $region38: #{tpu_custom_call.1} parent=1 // pred_check
      _
    $region39: #{tpu_custom_call.1} parent=1 // pred_check_branch
      %826 = sbr.rel (0) target = $region41
    $region40: #{tpu_custom_call.1} parent=1 // pred_region
      %828 = vsyncadd [#allocation4], 0
      %s829 = sshll.u32 [#allocation8], 4
      %s830 = int_to_ptr.vmem [resolvable:$true] %s829
      %s831 = sshll.u32 %s6, 4
      %s832 = int_to_ptr.hbm [resolvable:$true] %s831
      %837 = dma.vmem_to_hbm [thread:$0]  %s830, 256, %s832, [#allocation4], 128, 128, 8
    $region41: #{tpu_custom_call.1} parent=1 // pred_fallthru
      _
    // Predicated region
    $region42: #{tpu_custom_call.1} parent=1 // pred_check
      _
    $region43: #{tpu_custom_call.1} parent=1 // pred_check_branch
      %839 = sbr.rel (0) target = $region45
    $region44: #{tpu_custom_call.1} parent=1 // pred_region
      %841 = dma.done [#allocation4], 256
    $region45: #{tpu_custom_call.1} parent=1 // pred_fallthru
      _
    %842 = vsyncpa [#allocation3], 1
    %843 = vsyncpa [#allocation6], 1
    %844 = vsyncpa [#allocation4], 1

</llo_original>
